<compile_context>
chip_gen: v7x
topology: tpu7x:2x2x1
jax: 0.10.0
libtpu: 0.0.40
codegen_flags: <defaults>
</compile_context>

<pallas_src>
import functools

import jax
import jax.numpy as jnp
from jax.experimental import pallas as pl
from jax.experimental.pallas import tpu as pltpu


def _gated_kernel(h_ref, x_ref, p_ref, out_ref, *, alpha):
    """One (tb, D) row-tile of the gated update.

    p_ref is a packed (8, D) f32 parameter block:
      row 0: W_f[:, :D]  (h-half of gate_f weight)
      row 1: W_f[:, D:]  (x-half of gate_f weight)
      row 2: W_u[:, :D]  (h-half of gate_u weight)
      row 3: W_u[:, D:]  (x-half of gate_u weight)
      row 4: b_f broadcast across lanes
      row 5: b_u broadcast across lanes
      rows 6-7: zero padding (sublane alignment)
    """
    dt = h_ref.dtype
    h = h_ref[...]                              # (tb, D), native dtype
    x = x_ref[...]

    wfh = p_ref[0:1, :].astype(dt)              # (1, D)
    wfx = p_ref[1:2, :].astype(dt)
    wuh = p_ref[2:3, :].astype(dt)
    wux = p_ref[3:4, :].astype(dt)
    bf = p_ref[4:5, 0:1]                        # (1, 1) f32
    bu = p_ref[5:6, 0:1]

    # Gate logits on the VPU (elementwise mul/add) + XLU (lane reduce).
    # Products stay in the I/O dtype; the reduce accumulates in f32 so the
    # tanh argument keeps full precision.  These slots are otherwise idle in
    # a memory-bound kernel, so the logits are effectively free; no MXU.
    f_logit = jnp.sum(h * wfh + x * wfx, axis=-1, keepdims=True,
                      dtype=jnp.float32) + bf                       # (tb, 1)
    u_logit = jnp.sum(h * wuh + x * wux, axis=-1, keepdims=True,
                      dtype=jnp.float32) + bu                       # (tb, 1)

    f = (1.0 + alpha * jnp.tanh(f_logit)).astype(dt)                # EUP
    u = (1.0 + alpha * jnp.tanh(u_logit)).astype(dt)

    # Final combine in the native dtype (no f32 temporaries of the tiles).
    out_ref[...] = (f * h + u * x).astype(out_ref.dtype)


def gated_module_ref(h, x, w_f, b_f, w_u, b_u, alpha=0.1):
    """Pure-JAX reference (also the small-problem fallback)."""
    gate = jnp.concatenate([h, x], axis=1)
    f = alpha * jnp.tanh(gate @ w_f.T.astype(jnp.float32) + b_f)
    u = alpha * jnp.tanh(gate @ w_u.T.astype(jnp.float32) + b_u)
    return ((1.0 + f) * h + (1.0 + u) * x).astype(h.dtype)


def _vmem_capacity_bytes():
    """Generation-aware VMEM capacity; conservative (v7x per-TC) fallback."""
    try:
        return int(pltpu.get_tpu_info().vmem_capacity_bytes)
    except Exception:
        return 64 * 1024 * 1024


def _auto_tile_rows(B, D, itemsize, vmem_cap):
    """Largest row tile whose double-buffered h/x/out blocks fit the budget,
    capped so large problems keep >= 4 grid steps (v7x 2-TC sharding)."""
    # Declared working set per step = 2 buffers x 3 arrays x tb*D*itemsize.
    working_budget = min(int(vmem_cap * 0.4), 24 * 1024 * 1024)
    tb = working_budget // (6 * D * itemsize)
    if B * D * itemsize >= (2 << 20):           # large enough to split 4 ways
        tb = min(tb, max(pl.cdiv(B, 4), 8))
    return int(tb)


def gated_module(h, x, w_f, b_f, w_u, b_u, *, alpha=0.1, tile_b=None,
                 vmem_limit_bytes=None, use_pallas=None):
    """h, x: (B, D).  w_f, w_u: (1, 2D) PyTorch-style Linear weights.
    b_f, b_u: (1,) biases.  Returns (B, D) in the dtype of h."""
    B, D = h.shape
    assert x.shape == (B, D)
    assert h.dtype == x.dtype
    assert w_f.shape == (1, 2 * D) and w_u.shape == (1, 2 * D)
    assert b_f.shape == (1,) and b_u.shape == (1,)

    if use_pallas is None:
        # Tiny problems: pallas_call + DMA setup overhead dominates; use XLA.
        use_pallas = B * D >= 64 * 1024
    if not use_pallas:
        return gated_module_ref(h, x, w_f, b_f, w_u, b_u, alpha=alpha)

    itemsize = jnp.dtype(h.dtype).itemsize
    vmem_cap = _vmem_capacity_bytes()

    # Row tile: byte-budget based (several MiB of traffic per step), no fixed
    # row cap; >= 4 grid steps for large problems so both v7x TCs get work.
    if tile_b is None:
        tile_b = _auto_tile_rows(B, D, itemsize, vmem_cap)
    tb = int(tile_b)
    if tb < 8 and B > tb:
        # Extremely large D: even an 8-row block overruns the budget — fall
        # back to XLA rather than declare an oversized working set.
        return gated_module_ref(h, x, w_f, b_f, w_u, b_u, alpha=alpha)
    if tb >= B:
        tb = B                              # full-extent block is always legal
    else:
        tb = max(8, (tb // 8) * 8)          # sublane-aligned tile

    # Pack 4 weight halves + 2 biases into one lane-dense (8, D) f32 block
    # (one operand, one DMA descriptor, resident across all grid steps).
    wf = w_f.astype(jnp.float32)
    wu = w_u.astype(jnp.float32)
    params = jnp.stack([
        wf[0, :D], wf[0, D:],
        wu[0, :D], wu[0, D:],
        jnp.full((D,), b_f[0], dtype=jnp.float32),
        jnp.full((D,), b_u[0], dtype=jnp.float32),
        jnp.zeros((D,), jnp.float32),
        jnp.zeros((D,), jnp.float32),
    ])                                           # (8, D)

    grid = (pl.cdiv(B, tb),)

    # Generation-aware VMEM limit: cover the double-buffered blocks + params
    # with headroom, but never more than ~75% of physical VMEM (v7x: 64 MiB).
    if vmem_limit_bytes is None:
        declared = 2 * 3 * tb * D * itemsize + 2 * 8 * D * 4
        vmem_limit_bytes = max(32 * 1024 * 1024,
                               min(int(declared * 1.5),
                                   int(vmem_cap * 0.75)))

    # Note: for D < 128 the output block is not lane-dense (masked stores);
    # such tiny shapes are normally routed to the XLA fallback above.
    # TODO(synk): fold 128//D rows into the lane dim for forced small-D runs.
    row_spec = pl.BlockSpec((tb, D), lambda i: (i, 0))
    par_spec = pl.BlockSpec((8, D), lambda i: (0, 0))    # broadcast / resident

    kernel = functools.partial(_gated_kernel, alpha=float(alpha))

    cost = pl.CostEstimate(
        flops=9 * B * D,
        transcendentals=2 * B,
        bytes_accessed=3 * B * D * itemsize + 8 * D * 4,
    )

    return pl.pallas_call(
        kernel,
        out_shape=jax.ShapeDtypeStruct((B, D), h.dtype),
        grid_spec=pltpu.PrefetchScalarGridSpec(
            num_scalar_prefetch=0,
            grid=grid,
            in_specs=[row_spec, row_spec, par_spec],
            out_specs=row_spec,
        ),
        compiler_params=pltpu.CompilerParams(
            dimension_semantics=("parallel",),
            vmem_limit_bytes=int(vmem_limit_bytes)),
        cost_estimate=cost,
    )(h, x, params)


def _make_inputs(key, B, D, dtype=jnp.float32):
    k_h, k_x, k_wf, k_bf, k_wu, k_bu = jax.random.split(key, 6)
    h = jax.random.normal(k_h, (B, D), dtype=jnp.float32).astype(dtype)
    x = jax.random.normal(k_x, (B, D), dtype=jnp.float32).astype(dtype)
    # PyTorch Linear init: U(-1/sqrt(fan_in), 1/sqrt(fan_in)), fan_in = 2D.
    bound = 1.0 / jnp.sqrt(2.0 * D)
    w_f = jax.random.uniform(k_wf, (1, 2 * D), minval=-bound, maxval=bound,
                             dtype=jnp.float32)
    b_f = jax.random.uniform(k_bf, (1,), minval=-bound, maxval=bound,
                             dtype=jnp.float32)
    w_u = jax.random.uniform(k_wu, (1, 2 * D), minval=-bound, maxval=bound,
                             dtype=jnp.float32)
    b_u = jax.random.uniform(k_bu, (1,), minval=-bound, maxval=bound,
                             dtype=jnp.float32)
    return h, x, w_f, b_f, w_u, b_u


if __name__ == "__main__":
    alpha = 0.1
    key = jax.random.PRNGKey(0)
    k1, k2, k3, k4 = jax.random.split(key, 4)

    # Case 1: lane-dense feature dim, explicit tile, multi-step grid.
    h, x, w_f, b_f, w_u, b_u = _make_inputs(k1, 256, 128)
    out = gated_module(h, x, w_f, b_f, w_u, b_u, alpha=alpha,
                       tile_b=128, use_pallas=True)
    out = jax.block_until_ready(out)
    ref = gated_module_ref(h, x, w_f, b_f, w_u, b_u, alpha=alpha)
    assert out.shape == (256, 128)
    assert jnp.allclose(out, ref, atol=1e-5, rtol=1e-5), (
        f"case1 max abs err {jnp.max(jnp.abs(out - ref))}")

    # Case 2: tiny module-like shape (n_latent=32), forced onto the kernel path.
    h2, x2, w_f2, b_f2, w_u2, b_u2 = _make_inputs(k2, 8, 32)
    out2 = gated_module(h2, x2, w_f2, b_f2, w_u2, b_u2, alpha=alpha,
                        use_pallas=True)
    out2 = jax.block_until_ready(out2)
    ref2 = gated_module_ref(h2, x2, w_f2, b_f2, w_u2, b_u2, alpha=alpha)
    assert out2.shape == (8, 32)
    assert jnp.allclose(out2, ref2, atol=1e-5, rtol=1e-5), (
        f"case2 max abs err {jnp.max(jnp.abs(out2 - ref2))}")

    # Case 3: large-enough batch to exercise the auto tile + >=4-step grid.
    h3, x3, w_f3, b_f3, w_u3, b_u3 = _make_inputs(k3, 4096, 128)
    out3 = gated_module(h3, x3, w_f3, b_f3, w_u3, b_u3, alpha=alpha)
    out3 = jax.block_until_ready(out3)
    ref3 = gated_module_ref(h3, x3, w_f3, b_f3, w_u3, b_u3, alpha=alpha)
    assert out3.shape == (4096, 128)
    assert jnp.allclose(out3, ref3, atol=1e-5, rtol=1e-5), (
        f"case3 max abs err {jnp.max(jnp.abs(out3 - ref3))}")

    # Case 4: bf16 I/O path (native-dtype products, f32 reduce/tanh).
    h4, x4, w_f4, b_f4, w_u4, b_u4 = _make_inputs(k4, 512, 256,
                                                  dtype=jnp.bfloat16)
    out4 = gated_module(h4, x4, w_f4, b_f4, w_u4, b_u4, alpha=alpha)
    out4 = jax.block_until_ready(out4)
    ref4 = gated_module_ref(h4.astype(jnp.float32), x4.astype(jnp.float32),
                            w_f4, b_f4, w_u4, b_u4, alpha=alpha)
    assert out4.shape == (512, 256) and out4.dtype == jnp.bfloat16
    assert jnp.allclose(out4.astype(jnp.float32), ref4,
                        atol=5e-2, rtol=5e-2), (
        f"case4 max abs err {jnp.max(jnp.abs(out4.astype(jnp.float32) - ref4))}")

    print("KERNEL_OK")
</pallas_src>

<mosaic_0001>
module attributes {stable_mosaic.version = 11 : i64} {
  func.func @_gated_kernel(%arg0: i32, %arg1: memref<128x128xf32, #tpu.memory_space<vmem>>, %arg2: memref<128x128xf32, #tpu.memory_space<vmem>>, %arg3: memref<8x128xf32, #tpu.memory_space<vmem>>, %arg4: memref<128x128xf32, #tpu.memory_space<vmem>>) attributes {dimension_semantics = [#tpu.dimension_semantics<parallel>], iteration_bounds = array<i64: 2>, scalar_prefetch = 0 : i64, scratch_operands = 0 : i64, tpu.core_type = #tpu.core_type<tc>, window_params = [{transform_indices = @transform_0, window_bounds = array<i64: 128, 128>}, {transform_indices = @transform_1, window_bounds = array<i64: 128, 128>}, {pipeline_mode = #tpu.pipeline_mode<synchronous>, transform_indices = @transform_2, window_bounds = array<i64: 8, 128>}, {transform_indices = @transform_3, window_bounds = array<i64: 128, 128>}]} {
    %c0 = arith.constant 0 : index
    %c0_0 = arith.constant 0 : index
    %0 = vector.load %arg1[%c0, %c0_0] : memref<128x128xf32, #tpu.memory_space<vmem>>, vector<128x128xf32>
    %c0_1 = arith.constant 0 : index
    %c0_2 = arith.constant 0 : index
    %1 = vector.load %arg2[%c0_1, %c0_2] : memref<128x128xf32, #tpu.memory_space<vmem>>, vector<128x128xf32>
    %c0_3 = arith.constant 0 : index
    %c0_4 = arith.constant 0 : index
    %2 = vector.load %arg3[%c0_3, %c0_4] : memref<8x128xf32, #tpu.memory_space<vmem>>, vector<1x128xf32>
    %c1 = arith.constant 1 : index
    %c0_5 = arith.constant 0 : index
    %3 = vector.load %arg3[%c1, %c0_5] : memref<8x128xf32, #tpu.memory_space<vmem>>, vector<1x128xf32>
    %c2 = arith.constant 2 : index
    %c0_6 = arith.constant 0 : index
    %4 = vector.load %arg3[%c2, %c0_6] : memref<8x128xf32, #tpu.memory_space<vmem>>, vector<1x128xf32>
    %c3 = arith.constant 3 : index
    %c0_7 = arith.constant 0 : index
    %5 = vector.load %arg3[%c3, %c0_7] : memref<8x128xf32, #tpu.memory_space<vmem>>, vector<1x128xf32>
    %c4 = arith.constant 4 : index
    %c0_8 = arith.constant 0 : index
    %6 = vector.load %arg3[%c4, %c0_8] : memref<8x128xf32, #tpu.memory_space<vmem>>, vector<1x1xf32>
    %c5 = arith.constant 5 : index
    %c0_9 = arith.constant 0 : index
    %7 = vector.load %arg3[%c5, %c0_9] : memref<8x128xf32, #tpu.memory_space<vmem>>, vector<1x1xf32>
    %8 = vector.broadcast %2 : vector<1x128xf32> to vector<128x128xf32>
    %9 = arith.mulf %0, %8 : vector<128x128xf32>
    %10 = vector.broadcast %3 : vector<1x128xf32> to vector<128x128xf32>
    %11 = arith.mulf %1, %10 : vector<128x128xf32>
    %12 = arith.addf %9, %11 : vector<128x128xf32>
    %cst = arith.constant dense<0.000000e+00> : vector<128xf32>
    %13 = vector.multi_reduction <add>, %12, %cst [1] : vector<128x128xf32> to vector<128xf32>
    %14 = vector.shape_cast %13 : vector<128xf32> to vector<128x1xf32>
    %15 = vector.broadcast %6 : vector<1x1xf32> to vector<128x1xf32>
    %16 = arith.addf %14, %15 : vector<128x1xf32>
    %17 = vector.broadcast %4 : vector<1x128xf32> to vector<128x128xf32>
    %18 = arith.mulf %0, %17 : vector<128x128xf32>
    %19 = vector.broadcast %5 : vector<1x128xf32> to vector<128x128xf32>
    %20 = arith.mulf %1, %19 : vector<128x128xf32>
    %21 = arith.addf %18, %20 : vector<128x128xf32>
    %cst_10 = arith.constant dense<0.000000e+00> : vector<128xf32>
    %22 = vector.multi_reduction <add>, %21, %cst_10 [1] : vector<128x128xf32> to vector<128xf32>
    %23 = vector.shape_cast %22 : vector<128xf32> to vector<128x1xf32>
    %24 = vector.broadcast %7 : vector<1x1xf32> to vector<128x1xf32>
    %25 = arith.addf %23, %24 : vector<128x1xf32>
    %26 = math.tanh %16 : vector<128x1xf32>
    %cst_11 = arith.constant 1.000000e-01 : f32
    %27 = vector.broadcast %cst_11 : f32 to vector<128x1xf32>
    %28 = arith.mulf %27, %26 : vector<128x1xf32>
    %cst_12 = arith.constant 1.000000e+00 : f32
    %29 = vector.broadcast %cst_12 : f32 to vector<128x1xf32>
    %30 = arith.addf %29, %28 : vector<128x1xf32>
    %31 = math.tanh %25 : vector<128x1xf32>
    %cst_13 = arith.constant 1.000000e-01 : f32
    %32 = vector.broadcast %cst_13 : f32 to vector<128x1xf32>
    %33 = arith.mulf %32, %31 : vector<128x1xf32>
    %cst_14 = arith.constant 1.000000e+00 : f32
    %34 = vector.broadcast %cst_14 : f32 to vector<128x1xf32>
    %35 = arith.addf %34, %33 : vector<128x1xf32>
    %36 = vector.broadcast %30 : vector<128x1xf32> to vector<128x128xf32>
    %37 = arith.mulf %36, %0 : vector<128x128xf32>
    %38 = vector.broadcast %35 : vector<128x1xf32> to vector<128x128xf32>
    %39 = arith.mulf %38, %1 : vector<128x128xf32>
    %40 = arith.addf %37, %39 : vector<128x128xf32>
    %c0_15 = arith.constant 0 : index
    %c0_16 = arith.constant 0 : index
    %41 = vector.load %arg4[%c0_15, %c0_16] : memref<128x128xf32, #tpu.memory_space<vmem>>, vector<128x128xf32>
    tpu.vector_store %arg4[%c0_15, %c0_16], %40 {strides = array<i32>} : memref<128x128xf32, #tpu.memory_space<vmem>>, vector<128x128xf32>,
    return
  }
  func.func @transform_0(%arg0: i32) -> (i32, i32) {
    %c0_i32 = arith.constant 0 : i32
    %c0_i32_0 = arith.constant 0 : i32
    return %arg0, %c0_i32 : i32, i32
  }
  func.func @transform_1(%arg0: i32) -> (i32, i32) {
    %c0_i32 = arith.constant 0 : i32
    %c0_i32_0 = arith.constant 0 : i32
    return %arg0, %c0_i32 : i32, i32
  }
  func.func @transform_2(%arg0: i32) -> (i32, i32) {
    %c0_i32 = arith.constant 0 : i32
    %c0_i32_0 = arith.constant 0 : i32
    %c0_i32_1 = arith.constant 0 : i32
    return %c0_i32, %c0_i32_0 : i32, i32
  }
  func.func @transform_3(%arg0: i32) -> (i32, i32) {
    %c0_i32 = arith.constant 0 : i32
    %c0_i32_0 = arith.constant 0 : i32
    return %arg0, %c0_i32 : i32, i32
  }
}

</mosaic_0001>

<llo_original>
// kernel: tpu_custom_call.1
$region0: #{tpu_custom_call.1}
  #allocation0 [shape = 'u32[]', space=smem, size = 0x4, offset = 0x4, fixed_abs, tag = 'smem constant byte address 0x4 - core index']
  #allocation1 [shape = 'u32[144,128]{1,0:T(1,128)}', space=vmem, size = 0x12000, scoped, tag = 'internal scratch']
  %s0 = inlined_call_operand.hbm [shape: f32[256,128], index: 0, kind: input, shape index: {}]
  %s1 = inlined_call_operand.hbm [shape: f32[256,128], index: 1, kind: input, shape index: {}]
  %s2 = inlined_call_operand.hbm [shape: f32[8,128], index: 2, kind: input, shape index: {}]
  %s3 = inlined_call_operand.hbm [shape: f32[256,128], index: 3, kind: output, shape index: {}]
  %s4 = sld [smem:[#allocation0]]
  $region57: #{tpu_custom_call.1} parent=0
    _
  %s6 = ssub.s32 1, %s4
  %s7 = scalar_select 0, %s6, %s4
  $region1: #{tpu_custom_call.1} parent=0
    #allocation2 [shape = 'u8[131072]{0}', space=vmem, size = 0x20000, scoped, tag = 'input window, operand 0']
    #allocation3 [shape = 's32[2]{0}', space=sflag, size = 0x8, scoped, tag = 'scoped memory for tpu_custom_call.1']
    #allocation4 [shape = 's32[2]{0}', space=sflag, size = 0x8, scoped, tag = 'scoped memory for tpu_custom_call.1']
    #allocation5 [shape = 'u8[131072]{0}', space=vmem, size = 0x20000, scoped, tag = 'input window, operand 1']
    #allocation6 [shape = 's32[2]{0}', space=sflag, size = 0x8, scoped, tag = 'scoped memory for tpu_custom_call.1']
    #allocation7 [shape = 'u8[4096]{0}', space=vmem, size = 0x1000, scoped, tag = 'input window, operand 2, single buffered']
    #allocation8 [shape = 'u8[131072]{0}', space=vmem, size = 0x20000, scoped, tag = 'output window, operand 0']
    %8 = vsyncpa [#allocation3], 0
    %s9 = scalar_lea.sflag [#allocation3], 1
    %10 = vsyncpa %s9, 0
    %11 = vsyncpa [#allocation6], 0
    %s12 = scalar_lea.sflag [#allocation6], 1
    %13 = vsyncpa %s12, 0
    %14 = vsyncpa [#allocation4], 0
    %s15 = scalar_lea.sflag [#allocation4], 1
    %16 = vsyncpa %s15, 0
    loop: start=0, step=1, limit=4
    $region2: #{tpu_custom_call.1} parent=1 // loop_pre_header
      _
    $region3: #{tpu_custom_call.1} parent=1 // loop_header
      %s18 = sphi 0, %s22
      %p19 = scmp.ge.s32.totalorder %s18, 4
      %s28 = sphi 0, %s30
      %s31 = sphi 0, %s28
      %s32 = sphi 0, %s31
      %s48 = sphi 0, %s32
      %s54 = sphi 0, %s56
      %s57 = sphi 0, %s54
      %s58 = sphi 0, %s57
      %s74 = sphi 0, %s58
      %s78 = sphi 0, %s78
      %s80 = sphi 0, %s78
      %s81 = sphi 0, %s80
      %s95 = sphi 0, %s81
      %s101 = sphi 0, %s103
      %s104 = sphi 0, %s101
      %s105 = sphi 0, %s104
      %s121 = sphi 0, %s105
    $region4: #{tpu_custom_call.1} parent=1 // loop_header_branch
      %21 = sbr.rel (%p19) target = $region8
    $region5: #{tpu_custom_call.1} parent=1 // loop_body
      %s23 = ssub.s32 %s18, 1
      %s24 = ssub.s32 %s18, 2
      %s25 = sadd.s32 %s18, 1
      %s26 = ssub.s32 %s18, %s25
      %p27 = scmp.eq.s32.totalorder %s26, 0
      %s29 = sadd.s32 %s28, 1
      %s30 = scalar_select %p27, %s28, %s29
      %p33 = pneg %p27
      %p34 = scmp.eq.s32.totalorder %s18, 1
      %p35 = por %p33, %p34
      %p36 = scmp.ne.s32.totalorder %s28, %s31
      %p37 = scmp.eq.s32.totalorder %s18, 0
      %p38 = por %p36, %p37
      %p39 = scmp.ne.s32.totalorder %s28, %s31
      %p40 = scmp.eq.s32.totalorder %s23, 1
      %p41 = por %p39, %p40
      %p42 = scmp.ne.s32.totalorder %s31, %s32
      %p43 = scmp.eq.s32.totalorder %s23, 0
      %p44 = por %p42, %p43
      %p45 = scmp.ne.s32.totalorder %s31, %s32
      %p46 = scmp.eq.s32.totalorder %s24, 1
      %p47 = por %p45, %p46
      %p49 = scmp.ne.s32.totalorder %s32, %s48
      %p50 = scmp.eq.s32.totalorder %s24, 0
      %p51 = por %p49, %p50
      %s52 = ssub.s32 %s18, %s25
      %p53 = scmp.eq.s32.totalorder %s52, 0
      %s55 = sadd.s32 %s54, 1
      %s56 = scalar_select %p53, %s54, %s55
      %p59 = pneg %p53
      %p60 = scmp.eq.s32.totalorder %s18, 1
      %p61 = por %p59, %p60
      %p62 = scmp.ne.s32.totalorder %s54, %s57
      %p63 = scmp.eq.s32.totalorder %s18, 0
      %p64 = por %p62, %p63
      %p65 = scmp.ne.s32.totalorder %s54, %s57
      %p66 = scmp.eq.s32.totalorder %s23, 1
      %p67 = por %p65, %p66
      %p68 = scmp.ne.s32.totalorder %s57, %s58
      %p69 = scmp.eq.s32.totalorder %s23, 0
      %p70 = por %p68, %p69
      %p71 = scmp.ne.s32.totalorder %s57, %s58
      %p72 = scmp.eq.s32.totalorder %s24, 1
      %p73 = por %p71, %p72
      %p75 = scmp.ne.s32.totalorder %s58, %s74
      %p76 = scmp.eq.s32.totalorder %s24, 0
      %p77 = por %p75, %p76
      %s79 = sadd.s32 %s78, 1
      %p82 = scmp.eq.s32.totalorder %s18, 1
      %p83 = scmp.ne.s32.totalorder %s78, %s80
      %p84 = scmp.eq.s32.totalorder %s18, 0
      %p85 = por %p83, %p84
      %p86 = scmp.ne.s32.totalorder %s78, %s80
      %p87 = scmp.eq.s32.totalorder %s23, 1
      %p88 = por %p86, %p87
      %p89 = scmp.ne.s32.totalorder %s80, %s81
      %p90 = scmp.eq.s32.totalorder %s23, 0
      %p91 = por %p89, %p90
      %p92 = scmp.ne.s32.totalorder %s80, %s81
      %p93 = scmp.eq.s32.totalorder %s24, 1
      %p94 = por %p92, %p93
      %p96 = scmp.ne.s32.totalorder %s81, %s95
      %p97 = scmp.eq.s32.totalorder %s24, 0
      %p98 = por %p96, %p97
      %s99 = ssub.s32 %s18, %s25
      %p100 = scmp.eq.s32.totalorder %s99, 0
      %s102 = sadd.s32 %s101, 1
      %s103 = scalar_select %p100, %s101, %s102
      %p106 = pneg %p100
      %p107 = scmp.eq.s32.totalorder %s18, 1
      %p108 = por %p106, %p107
      %p109 = scmp.ne.s32.totalorder %s101, %s104
      %p110 = scmp.eq.s32.totalorder %s18, 0
      %p111 = por %p109, %p110
      %p112 = scmp.ne.s32.totalorder %s101, %s104
      %p113 = scmp.eq.s32.totalorder %s23, 1
      %p114 = por %p112, %p113
      %p115 = scmp.ne.s32.totalorder %s104, %s105
      %p116 = scmp.eq.s32.totalorder %s23, 0
      %p117 = por %p115, %p116
      %p118 = scmp.ne.s32.totalorder %s104, %s105
      %p119 = scmp.eq.s32.totalorder %s24, 1
      %p120 = por %p118, %p119
      %p122 = scmp.ne.s32.totalorder %s105, %s121
      %p123 = scmp.eq.s32.totalorder %s24, 0
      %p124 = por %p122, %p123
      %p125 = scmp.le.s32.totalorder 1, %s18
      %p126 = scmp.lt.s32.totalorder %s18, 3
      %p127 = pnand %p125, %p126
      %p128 = pneg %p127
      // Predicated region
      $region9: #{tpu_custom_call.1} parent=5 // pred_check
        _
      $region10: #{tpu_custom_call.1} parent=5 // pred_check_branch
        %130 = sbr.rel (%p127) target = $region12
      $region11: #{tpu_custom_call.1} parent=5 // pred_region
        %s131 = ssub.s32 %s18, 1
        // Predicated region
        $region13: #{tpu_custom_call.1} parent=11 // pred_check
          %p132 = pneg %p91
        $region14: #{tpu_custom_call.1} parent=11 // pred_check_branch
          %134 = sbr.rel (%p132) target = $region16
        $region15: #{tpu_custom_call.1} parent=11 // pred_region
          %s136 = ssub.s32 128, 128
          %137 = vsyncadd [#allocation6], %s136
          %s139 = sshll.u32 [#allocation7], 4
          %s140 = int_to_ptr.vmem [resolvable:$true] %s139
          %142 = dma.hbm_to_vmem [thread:$0]  %s2, 128, %s140, [#allocation6]
        $region16: #{tpu_custom_call.1} parent=11 // pred_fallthru
          _
      $region12: #{tpu_custom_call.1} parent=5 // pred_fallthru
        _
      %p143 = scmp.lt.s32.totalorder %s18, 2
      // Predicated region
      $region17: #{tpu_custom_call.1} parent=5 // pred_check
        %p144 = pneg %p143
      $region18: #{tpu_custom_call.1} parent=5 // pred_check_branch
        %146 = sbr.rel (%p144) target = $region20
      $region19: #{tpu_custom_call.1} parent=5 // pred_region
        // Predicated region
        $region21: #{tpu_custom_call.1} parent=19 // pred_check
          %p147 = pneg %p38
        $region22: #{tpu_custom_call.1} parent=19 // pred_check_branch
          %149 = sbr.rel (%p147) target = $region24
        $region23: #{tpu_custom_call.1} parent=19 // pred_region
          %s150 = sand.u32 %s28, 1
          %s151 = scalar_lea.sflag [#allocation3], %s150
          %s152 = sand.u32 %s28, 1
          %s153 = smul.addr %s152, 128
          %s154 = scalar_lea.vmem [#allocation2], %s153
          %s155 = smul.u32 16, %s18
          %s157 = ssub.s32 2048, 2048
          %158 = vsyncadd %s151, %s157
          %s159 = smul.addr %s155, 128
          %s160 = scalar_lea.hbm %s0, %s159
          %s161 = sshll.u32 %s154, 4
          %s162 = int_to_ptr.vmem [resolvable:$true] %s161
          %167 = dma.hbm_to_vmem [thread:$0]  %s160, 2048, %s162, %s151, 128, 128, 8
        $region24: #{tpu_custom_call.1} parent=19 // pred_fallthru
          _
        // Predicated region
        $region25: #{tpu_custom_call.1} parent=19 // pred_check
          %p168 = pneg %p64
        $region26: #{tpu_custom_call.1} parent=19 // pred_check_branch
          %170 = sbr.rel (%p168) target = $region28
        $region27: #{tpu_custom_call.1} parent=19 // pred_region
          %s171 = sand.u32 %s18, 1
          %s172 = scalar_lea.sflag [#allocation6], %s171
          %s173 = sand.u32 %s54, 1
          %s174 = smul.addr %s173, 128
          %s175 = scalar_lea.vmem [#allocation5], %s174
          %s176 = smul.u32 16, %s18
          %s178 = ssub.s32 2048, 2048
          %179 = vsyncadd %s172, %s178
          %s180 = smul.addr %s176, 128
          %s181 = scalar_lea.hbm %s1, %s180
          %s182 = sshll.u32 %s175, 4
          %s183 = int_to_ptr.vmem [resolvable:$true] %s182
          %188 = dma.hbm_to_vmem [thread:$0]  %s181, 2048, %s183, %s172, 128, 128, 8
        $region28: #{tpu_custom_call.1} parent=19 // pred_fallthru
          _
      $region20: #{tpu_custom_call.1} parent=5 // pred_fallthru
        _
      %p189 = scmp.le.s32.totalorder 1, %s18
      %p190 = scmp.lt.s32.totalorder %s18, 3
      %p191 = pnand %p189, %p190
      %p192 = pneg %p191
      // Predicated region
      $region29: #{tpu_custom_call.1} parent=5 // pred_check
        _
      $region30: #{tpu_custom_call.1} parent=5 // pred_check_branch
        %194 = sbr.rel (%p191) target = $region32
      $region31: #{tpu_custom_call.1} parent=5 // pred_region
        %s195 = ssub.s32 %s18, 1
        %s196 = sand.u32 %s31, 1
        %s197 = scalar_lea.sflag [#allocation3], %s196
        %s198 = sand.u32 %s31, 1
        %s199 = smul.addr %s198, 128
        %s200 = scalar_lea.vmem [#allocation2], %s199
        // Predicated region
        $region33: #{tpu_custom_call.1} parent=31 // pred_check
          %p201 = pneg %p44
        $region34: #{tpu_custom_call.1} parent=31 // pred_check_branch
          %203 = sbr.rel (%p201) target = $region36
        $region35: #{tpu_custom_call.1} parent=31 // pred_region
          %204 = dma.done %s197, 2048
        $region36: #{tpu_custom_call.1} parent=31 // pred_fallthru
          _
        %s205 = sand.u32 %s23, 1
        %s206 = scalar_lea.sflag [#allocation6], %s205
        %s207 = sand.u32 %s57, 1
        %s208 = smul.addr %s207, 128
        %s209 = scalar_lea.vmem [#allocation5], %s208
        // Predicated region
        $region37: #{tpu_custom_call.1} parent=31 // pred_check
          %p210 = pneg %p70
        $region38: #{tpu_custom_call.1} parent=31 // pred_check_branch
          %212 = sbr.rel (%p210) target = $region40
        $region39: #{tpu_custom_call.1} parent=31 // pred_region
          %213 = dma.done %s206, 2048
        $region40: #{tpu_custom_call.1} parent=31 // pred_fallthru
          _
        // Predicated region
        $region41: #{tpu_custom_call.1} parent=31 // pred_check
          %p214 = pneg %p91
        $region42: #{tpu_custom_call.1} parent=31 // pred_check_branch
          %216 = sbr.rel (%p214) target = $region44
        $region43: #{tpu_custom_call.1} parent=31 // pred_region
          %217 = dma.done [#allocation6], 128
        $region44: #{tpu_custom_call.1} parent=31 // pred_fallthru
          _
        %s218 = sand.u32 %s31, 1
        %s219 = scalar_lea.sflag [#allocation3], %s218
        %s220 = sand.u32 %s31, 1
        %s221 = smul.addr %s220, 128
        %s222 = scalar_lea.vmem [#allocation2], %s221
        %p223 = pneg %p44
        %p224 = pneg %p41
        %s225 = sand.u32 %s23, 1
        %s226 = scalar_lea.sflag [#allocation6], %s225
        %s227 = sand.u32 %s57, 1
        %s228 = smul.addr %s227, 128
        %s229 = scalar_lea.vmem [#allocation5], %s228
        %p230 = pneg %p70
        %p231 = pneg %p67
        %p232 = pneg %p91
        %p233 = pneg %p88
        %p234 = pneg %p117
        %p235 = pneg %p114
        %s236 = sand.u32 %s104, 1
        %s237 = scalar_lea.sflag [#allocation4], %s236
        %s238 = sand.u32 %s104, 1
        %s239 = smul.addr %s238, 128
        %s240 = scalar_lea.vmem [#allocation8], %s239
        %s241 = smul.u32 16, %s23
        %s242 = smul.u32 16, %s23
        %s243 = smul.u32 16, %s23
        %v244 = vld [vmem:[%s200] sm:$0xff]
        %v245 = vld [vmem:[%s200 + $0x8] sm:$0xff]
        %v246 = vld [vmem:[%s200 + $0x10] sm:$0xff]
        %v247 = vld [vmem:[%s200 + $0x18] sm:$0xff]
        %v248 = vld [vmem:[%s200 + $0x20] sm:$0xff]
        %v249 = vld [vmem:[%s200 + $0x28] sm:$0xff]
        %v250 = vld [vmem:[%s200 + $0x30] sm:$0xff]
        %v251 = vld [vmem:[%s200 + $0x38] sm:$0xff]
        %v252 = vld [vmem:[%s200 + $0x40] sm:$0xff]
        %v253 = vld [vmem:[%s200 + $0x48] sm:$0xff]
        %v254 = vld [vmem:[%s200 + $0x50] sm:$0xff]
        %v255 = vld [vmem:[%s200 + $0x58] sm:$0xff]
        %v256 = vld [vmem:[%s200 + $0x60] sm:$0xff]
        %v257 = vld [vmem:[%s200 + $0x68] sm:$0xff]
        %v258 = vld [vmem:[%s200 + $0x70] sm:$0xff]
        %v259 = vld [vmem:[%s200 + $0x78] sm:$0xff]
        %v260 = vld [vmem:[%s209] sm:$0xff]
        %v261 = vld [vmem:[%s209 + $0x8] sm:$0xff]
        %v262 = vld [vmem:[%s209 + $0x10] sm:$0xff]
        %v263 = vld [vmem:[%s209 + $0x18] sm:$0xff]
        %v264 = vld [vmem:[%s209 + $0x20] sm:$0xff]
        %v265 = vld [vmem:[%s209 + $0x28] sm:$0xff]
        %v266 = vld [vmem:[%s209 + $0x30] sm:$0xff]
        %v267 = vld [vmem:[%s209 + $0x38] sm:$0xff]
        %v268 = vld [vmem:[%s209 + $0x40] sm:$0xff]
        %v269 = vld [vmem:[%s209 + $0x48] sm:$0xff]
        %v270 = vld [vmem:[%s209 + $0x50] sm:$0xff]
        %v271 = vld [vmem:[%s209 + $0x58] sm:$0xff]
        %v272 = vld [vmem:[%s209 + $0x60] sm:$0xff]
        %v273 = vld [vmem:[%s209 + $0x68] sm:$0xff]
        %v274 = vld [vmem:[%s209 + $0x70] sm:$0xff]
        %v275 = vld [vmem:[%s209 + $0x78] sm:$0xff]
        %v276 = vld [vmem:[#allocation7] sm:$0x1]
        %v277 = vld [vmem:[#allocation7 + $0x1] sm:$0x1]
        %v278 = vld [vmem:[#allocation7 + $0x2] sm:$0x1]
        %v279 = vld [vmem:[#allocation7 + $0x3] sm:$0x1]
        %v280 = vld [vmem:[#allocation7 + $0x4] sm:$0x1]
        %v281 = vld [vmem:[#allocation7 + $0x5] sm:$0x1]
        %v282 = vlaneseq
        %v283 = vshrl.u32 %v282, 7
        %v284 = vsub.s32 0, %v283
        %v285 = vrot.slane %v276, %v284
        %v286 = vmul.f32 %v244, %v285
        %v287 = vmul.f32 %v245, %v285
        %v288 = vmul.f32 %v246, %v285
        %v289 = vmul.f32 %v247, %v285
        %v290 = vmul.f32 %v248, %v285
        %v291 = vmul.f32 %v249, %v285
        %v292 = vmul.f32 %v250, %v285
        %v293 = vmul.f32 %v251, %v285
        %v294 = vmul.f32 %v252, %v285
        %v295 = vmul.f32 %v253, %v285
        %v296 = vmul.f32 %v254, %v285
        %v297 = vmul.f32 %v255, %v285
        %v298 = vmul.f32 %v256, %v285
        %v299 = vmul.f32 %v257, %v285
        %v300 = vmul.f32 %v258, %v285
        %v301 = vmul.f32 %v259, %v285
        %v302 = vlaneseq
        %v303 = vshrl.u32 %v302, 7
        %v304 = vsub.s32 0, %v303
        %v305 = vrot.slane %v277, %v304
        %v306 = vmul.f32 %v260, %v305
        %v307 = vmul.f32 %v261, %v305
        %v308 = vmul.f32 %v262, %v305
        %v309 = vmul.f32 %v263, %v305
        %v310 = vmul.f32 %v264, %v305
        %v311 = vmul.f32 %v265, %v305
        %v312 = vmul.f32 %v266, %v305
        %v313 = vmul.f32 %v267, %v305
        %v314 = vmul.f32 %v268, %v305
        %v315 = vmul.f32 %v269, %v305
        %v316 = vmul.f32 %v270, %v305
        %v317 = vmul.f32 %v271, %v305
        %v318 = vmul.f32 %v272, %v305
        %v319 = vmul.f32 %v273, %v305
        %v320 = vmul.f32 %v274, %v305
        %v321 = vmul.f32 %v275, %v305
        %v322 = vadd.f32 %v286, %v306
        %v323 = vadd.f32 %v287, %v307
        %v324 = vadd.f32 %v288, %v308
        %v325 = vadd.f32 %v289, %v309
        %v326 = vadd.f32 %v290, %v310
        %v327 = vadd.f32 %v291, %v311
        %v328 = vadd.f32 %v292, %v312
        %v329 = vadd.f32 %v293, %v313
        %v330 = vadd.f32 %v294, %v314
        %v331 = vadd.f32 %v295, %v315
        %v332 = vadd.f32 %v296, %v316
        %v333 = vadd.f32 %v297, %v317
        %v334 = vadd.f32 %v298, %v318
        %v335 = vadd.f32 %v299, %v319
        %v336 = vadd.f32 %v300, %v320
        %v337 = vadd.f32 %v301, %v321
        %338 = vadd.xlane.f32.xlu0 %v322
        %v339 = vpop.xlane.xlu0 %338
        %340 = vadd.xlane.f32.xlu0 %v323
        %v341 = vpop.xlane.xlu0 %340
        %342 = vadd.xlane.f32.xlu0 %v324
        %v343 = vpop.xlane.xlu0 %342
        %344 = vadd.xlane.f32.xlu0 %v325
        %v345 = vpop.xlane.xlu0 %344
        %346 = vadd.xlane.f32.xlu0 %v326
        %v347 = vpop.xlane.xlu0 %346
        %348 = vadd.xlane.f32.xlu0 %v327
        %v349 = vpop.xlane.xlu0 %348
        %350 = vadd.xlane.f32.xlu0 %v328
        %v351 = vpop.xlane.xlu0 %350
        %352 = vadd.xlane.f32.xlu0 %v329
        %v353 = vpop.xlane.xlu0 %352
        %354 = vadd.xlane.f32.xlu0 %v330
        %v355 = vpop.xlane.xlu0 %354
        %356 = vadd.xlane.f32.xlu0 %v331
        %v357 = vpop.xlane.xlu0 %356
        %358 = vadd.xlane.f32.xlu0 %v332
        %v359 = vpop.xlane.xlu0 %358
        %360 = vadd.xlane.f32.xlu0 %v333
        %v361 = vpop.xlane.xlu0 %360
        %362 = vadd.xlane.f32.xlu0 %v334
        %v363 = vpop.xlane.xlu0 %362
        %364 = vadd.xlane.f32.xlu0 %v335
        %v365 = vpop.xlane.xlu0 %364
        %366 = vadd.xlane.f32.xlu0 %v336
        %v367 = vpop.xlane.xlu0 %366
        %368 = vadd.xlane.f32.xlu0 %v337
        %v369 = vpop.xlane.xlu0 %368
        %v370 = vlaneseq
        %v371 = vshrl.u32 %v370, 7
        %v372 = vsub.s32 0, %v371
        %v373 = vrot.slane %v280, %v372
        %v374 = vadd.f32 %v339, %v373
        %v375 = vadd.f32 %v341, %v373
        %v376 = vadd.f32 %v343, %v373
        %v377 = vadd.f32 %v345, %v373
        %v378 = vadd.f32 %v347, %v373
        %v379 = vadd.f32 %v349, %v373
        %v380 = vadd.f32 %v351, %v373
        %v381 = vadd.f32 %v353, %v373
        %v382 = vadd.f32 %v355, %v373
        %v383 = vadd.f32 %v357, %v373
        %v384 = vadd.f32 %v359, %v373
        %v385 = vadd.f32 %v361, %v373
        %v386 = vadd.f32 %v363, %v373
        %v387 = vadd.f32 %v365, %v373
        %v388 = vadd.f32 %v367, %v373
        %v389 = vadd.f32 %v369, %v373
        %v390 = vlaneseq
        %v391 = vshrl.u32 %v390, 7
        %v392 = vsub.s32 0, %v391
        %v393 = vrot.slane %v278, %v392
        %v394 = vmul.f32 %v244, %v393
        %v395 = vmul.f32 %v245, %v393
        %v396 = vmul.f32 %v246, %v393
        %v397 = vmul.f32 %v247, %v393
        %v398 = vmul.f32 %v248, %v393
        %v399 = vmul.f32 %v249, %v393
        %v400 = vmul.f32 %v250, %v393
        %v401 = vmul.f32 %v251, %v393
        %v402 = vmul.f32 %v252, %v393
        %v403 = vmul.f32 %v253, %v393
        %v404 = vmul.f32 %v254, %v393
        %v405 = vmul.f32 %v255, %v393
        %v406 = vmul.f32 %v256, %v393
        %v407 = vmul.f32 %v257, %v393
        %v408 = vmul.f32 %v258, %v393
        %v409 = vmul.f32 %v259, %v393
        %v410 = vlaneseq
        %v411 = vshrl.u32 %v410, 7
        %v412 = vsub.s32 0, %v411
        %v413 = vrot.slane %v279, %v412
        %v414 = vmul.f32 %v260, %v413
        %v415 = vmul.f32 %v261, %v413
        %v416 = vmul.f32 %v262, %v413
        %v417 = vmul.f32 %v263, %v413
        %v418 = vmul.f32 %v264, %v413
        %v419 = vmul.f32 %v265, %v413
        %v420 = vmul.f32 %v266, %v413
        %v421 = vmul.f32 %v267, %v413
        %v422 = vmul.f32 %v268, %v413
        %v423 = vmul.f32 %v269, %v413
        %v424 = vmul.f32 %v270, %v413
        %v425 = vmul.f32 %v271, %v413
        %v426 = vmul.f32 %v272, %v413
        %v427 = vmul.f32 %v273, %v413
        %v428 = vmul.f32 %v274, %v413
        %v429 = vmul.f32 %v275, %v413
        %v430 = vadd.f32 %v394, %v414
        %v431 = vadd.f32 %v395, %v415
        %v432 = vadd.f32 %v396, %v416
        %v433 = vadd.f32 %v397, %v417
        %v434 = vadd.f32 %v398, %v418
        %v435 = vadd.f32 %v399, %v419
        %v436 = vadd.f32 %v400, %v420
        %v437 = vadd.f32 %v401, %v421
        %v438 = vadd.f32 %v402, %v422
        %v439 = vadd.f32 %v403, %v423
        %v440 = vadd.f32 %v404, %v424
        %v441 = vadd.f32 %v405, %v425
        %v442 = vadd.f32 %v406, %v426
        %v443 = vadd.f32 %v407, %v427
        %v444 = vadd.f32 %v408, %v428
        %v445 = vadd.f32 %v409, %v429
        %446 = vadd.xlane.f32.xlu0 %v430
        %v447 = vpop.xlane.xlu0 %446
        %448 = vadd.xlane.f32.xlu0 %v431
        %v449 = vpop.xlane.xlu0 %448
        %450 = vadd.xlane.f32.xlu0 %v432
        %v451 = vpop.xlane.xlu0 %450
        %452 = vadd.xlane.f32.xlu0 %v433
        %v453 = vpop.xlane.xlu0 %452
        %454 = vadd.xlane.f32.xlu0 %v434
        %v455 = vpop.xlane.xlu0 %454
        %456 = vadd.xlane.f32.xlu0 %v435
        %v457 = vpop.xlane.xlu0 %456
        %458 = vadd.xlane.f32.xlu0 %v436
        %v459 = vpop.xlane.xlu0 %458
        %460 = vadd.xlane.f32.xlu0 %v437
        %v461 = vpop.xlane.xlu0 %460
        %462 = vadd.xlane.f32.xlu0 %v438
        %v463 = vpop.xlane.xlu0 %462
        %464 = vadd.xlane.f32.xlu0 %v439
        %v465 = vpop.xlane.xlu0 %464
        %466 = vadd.xlane.f32.xlu0 %v440
        %v467 = vpop.xlane.xlu0 %466
        %468 = vadd.xlane.f32.xlu0 %v441
        %v469 = vpop.xlane.xlu0 %468
        %470 = vadd.xlane.f32.xlu0 %v442
        %v471 = vpop.xlane.xlu0 %470
        %472 = vadd.xlane.f32.xlu0 %v443
        %v473 = vpop.xlane.xlu0 %472
        %474 = vadd.xlane.f32.xlu0 %v444
        %v475 = vpop.xlane.xlu0 %474
        %476 = vadd.xlane.f32.xlu0 %v445
        %v477 = vpop.xlane.xlu0 %476
        %v478 = vlaneseq
        %v479 = vshrl.u32 %v478, 7
        %v480 = vsub.s32 0, %v479
        %v481 = vrot.slane %v281, %v480
        %v482 = vadd.f32 %v447, %v481
        %v483 = vadd.f32 %v449, %v481
        %v484 = vadd.f32 %v451, %v481
        %v485 = vadd.f32 %v453, %v481
        %v486 = vadd.f32 %v455, %v481
        %v487 = vadd.f32 %v457, %v481
        %v488 = vadd.f32 %v459, %v481
        %v489 = vadd.f32 %v461, %v481
        %v490 = vadd.f32 %v463, %v481
        %v491 = vadd.f32 %v465, %v481
        %v492 = vadd.f32 %v467, %v481
        %v493 = vadd.f32 %v469, %v481
        %v494 = vadd.f32 %v471, %v481
        %v495 = vadd.f32 %v473, %v481
        %v496 = vadd.f32 %v475, %v481
        %v497 = vadd.f32 %v477, %v481
        %v498 = vtanh.pop %v374
        %v499 = vtanh.pop %v375
        %v500 = vtanh.pop %v376
        %v501 = vtanh.pop %v377
        %v502 = vtanh.pop %v378
        %v503 = vtanh.pop %v379
        %v504 = vtanh.pop %v380
        %v505 = vtanh.pop %v381
        %v506 = vtanh.pop %v382
        %v507 = vtanh.pop %v383
        %v508 = vtanh.pop %v384
        %v509 = vtanh.pop %v385
        %v510 = vtanh.pop %v386
        %v511 = vtanh.pop %v387
        %v512 = vtanh.pop %v388
        %v513 = vtanh.pop %v389
        %v514 = vmul.f32 %v498, 0.1
        %v515 = vmul.f32 %v499, 0.1
        %v516 = vmul.f32 %v500, 0.1
        %v517 = vmul.f32 %v501, 0.1
        %v518 = vmul.f32 %v502, 0.1
        %v519 = vmul.f32 %v503, 0.1
        %v520 = vmul.f32 %v504, 0.1
        %v521 = vmul.f32 %v505, 0.1
        %v522 = vmul.f32 %v506, 0.1
        %v523 = vmul.f32 %v507, 0.1
        %v524 = vmul.f32 %v508, 0.1
        %v525 = vmul.f32 %v509, 0.1
        %v526 = vmul.f32 %v510, 0.1
        %v527 = vmul.f32 %v511, 0.1
        %v528 = vmul.f32 %v512, 0.1
        %v529 = vmul.f32 %v513, 0.1
        %v530 = vadd.f32 %v514, 1.0
        %v531 = vadd.f32 %v515, 1.0
        %v532 = vadd.f32 %v516, 1.0
        %v533 = vadd.f32 %v517, 1.0
        %v534 = vadd.f32 %v518, 1.0
        %v535 = vadd.f32 %v519, 1.0
        %v536 = vadd.f32 %v520, 1.0
        %v537 = vadd.f32 %v521, 1.0
        %v538 = vadd.f32 %v522, 1.0
        %v539 = vadd.f32 %v523, 1.0
        %v540 = vadd.f32 %v524, 1.0
        %v541 = vadd.f32 %v525, 1.0
        %v542 = vadd.f32 %v526, 1.0
        %v543 = vadd.f32 %v527, 1.0
        %v544 = vadd.f32 %v528, 1.0
        %v545 = vadd.f32 %v529, 1.0
        %v546 = vtanh.pop %v482
        %v547 = vtanh.pop %v483
        %v548 = vtanh.pop %v484
        %v549 = vtanh.pop %v485
        %v550 = vtanh.pop %v486
        %v551 = vtanh.pop %v487
        %v552 = vtanh.pop %v488
        %v553 = vtanh.pop %v489
        %v554 = vtanh.pop %v490
        %v555 = vtanh.pop %v491
        %v556 = vtanh.pop %v492
        %v557 = vtanh.pop %v493
        %v558 = vtanh.pop %v494
        %v559 = vtanh.pop %v495
        %v560 = vtanh.pop %v496
        %v561 = vtanh.pop %v497
        %v562 = vmul.f32 %v546, 0.1
        %v563 = vmul.f32 %v547, 0.1
        %v564 = vmul.f32 %v548, 0.1
        %v565 = vmul.f32 %v549, 0.1
        %v566 = vmul.f32 %v550, 0.1
        %v567 = vmul.f32 %v551, 0.1
        %v568 = vmul.f32 %v552, 0.1
        %v569 = vmul.f32 %v553, 0.1
        %v570 = vmul.f32 %v554, 0.1
        %v571 = vmul.f32 %v555, 0.1
        %v572 = vmul.f32 %v556, 0.1
        %v573 = vmul.f32 %v557, 0.1
        %v574 = vmul.f32 %v558, 0.1
        %v575 = vmul.f32 %v559, 0.1
        %v576 = vmul.f32 %v560, 0.1
        %v577 = vmul.f32 %v561, 0.1
        %v578 = vadd.f32 %v562, 1.0
        %v579 = vadd.f32 %v563, 1.0
        %v580 = vadd.f32 %v564, 1.0
        %v581 = vadd.f32 %v565, 1.0
        %v582 = vadd.f32 %v566, 1.0
        %v583 = vadd.f32 %v567, 1.0
        %v584 = vadd.f32 %v568, 1.0
        %v585 = vadd.f32 %v569, 1.0
        %v586 = vadd.f32 %v570, 1.0
        %v587 = vadd.f32 %v571, 1.0
        %v588 = vadd.f32 %v572, 1.0
        %v589 = vadd.f32 %v573, 1.0
        %v590 = vadd.f32 %v574, 1.0
        %v591 = vadd.f32 %v575, 1.0
        %v592 = vadd.f32 %v576, 1.0
        %v593 = vadd.f32 %v577, 1.0
        %595 = vset.pattern.permute.xlu0 0
        %596 = vperm.xlu0 %595, %v530
        %v597 = vpop.permute.xlu0 %596
        %600 = vset.pattern.permute.xlu0 0
        %601 = vperm.xlu0 %600, %v531
        %v602 = vpop.permute.xlu0 %601
        %605 = vset.pattern.permute.xlu0 0
        %606 = vperm.xlu0 %605, %v532
        %v607 = vpop.permute.xlu0 %606
        %610 = vset.pattern.permute.xlu0 0
        %611 = vperm.xlu0 %610, %v533
        %v612 = vpop.permute.xlu0 %611
        %615 = vset.pattern.permute.xlu0 0
        %616 = vperm.xlu0 %615, %v534
        %v617 = vpop.permute.xlu0 %616
        %620 = vset.pattern.permute.xlu0 0
        %621 = vperm.xlu0 %620, %v535
        %v622 = vpop.permute.xlu0 %621
        %625 = vset.pattern.permute.xlu0 0
        %626 = vperm.xlu0 %625, %v536
        %v627 = vpop.permute.xlu0 %626
        %630 = vset.pattern.permute.xlu0 0
        %631 = vperm.xlu0 %630, %v537
        %v632 = vpop.permute.xlu0 %631
        %635 = vset.pattern.permute.xlu0 0
        %636 = vperm.xlu0 %635, %v538
        %v637 = vpop.permute.xlu0 %636
        %640 = vset.pattern.permute.xlu0 0
        %641 = vperm.xlu0 %640, %v539
        %v642 = vpop.permute.xlu0 %641
        %645 = vset.pattern.permute.xlu0 0
        %646 = vperm.xlu0 %645, %v540
        %v647 = vpop.permute.xlu0 %646
        %650 = vset.pattern.permute.xlu0 0
        %651 = vperm.xlu0 %650, %v541
        %v652 = vpop.permute.xlu0 %651
        %655 = vset.pattern.permute.xlu0 0
        %656 = vperm.xlu0 %655, %v542
        %v657 = vpop.permute.xlu0 %656
        %660 = vset.pattern.permute.xlu0 0
        %661 = vperm.xlu0 %660, %v543
        %v662 = vpop.permute.xlu0 %661
        %665 = vset.pattern.permute.xlu0 0
        %666 = vperm.xlu0 %665, %v544
        %v667 = vpop.permute.xlu0 %666
        %670 = vset.pattern.permute.xlu0 0
        %671 = vperm.xlu0 %670, %v545
        %v672 = vpop.permute.xlu0 %671
        %v674 = vmul.f32 %v597, %v244
        %v675 = vmul.f32 %v602, %v245
        %v676 = vmul.f32 %v607, %v246
        %v677 = vmul.f32 %v612, %v247
        %v678 = vmul.f32 %v617, %v248
        %v679 = vmul.f32 %v622, %v249
        %v680 = vmul.f32 %v627, %v250
        %v681 = vmul.f32 %v632, %v251
        %v682 = vmul.f32 %v637, %v252
        %v683 = vmul.f32 %v642, %v253
        %v684 = vmul.f32 %v647, %v254
        %v685 = vmul.f32 %v652, %v255
        %v686 = vmul.f32 %v657, %v256
        %v687 = vmul.f32 %v662, %v257
        %v688 = vmul.f32 %v667, %v258
        %v689 = vmul.f32 %v672, %v259
        %691 = vset.pattern.permute.xlu0 0
        %692 = vperm.xlu0 %691, %v578
        %v693 = vpop.permute.xlu0 %692
        %696 = vset.pattern.permute.xlu0 0
        %697 = vperm.xlu0 %696, %v579
        %v698 = vpop.permute.xlu0 %697
        %701 = vset.pattern.permute.xlu0 0
        %702 = vperm.xlu0 %701, %v580
        %v703 = vpop.permute.xlu0 %702
        %706 = vset.pattern.permute.xlu0 0
        %707 = vperm.xlu0 %706, %v581
        %v708 = vpop.permute.xlu0 %707
        %711 = vset.pattern.permute.xlu0 0
        %712 = vperm.xlu0 %711, %v582
        %v713 = vpop.permute.xlu0 %712
        %716 = vset.pattern.permute.xlu0 0
        %717 = vperm.xlu0 %716, %v583
        %v718 = vpop.permute.xlu0 %717
        %721 = vset.pattern.permute.xlu0 0
        %722 = vperm.xlu0 %721, %v584
        %v723 = vpop.permute.xlu0 %722
        %726 = vset.pattern.permute.xlu0 0
        %727 = vperm.xlu0 %726, %v585
        %v728 = vpop.permute.xlu0 %727
        %731 = vset.pattern.permute.xlu0 0
        %732 = vperm.xlu0 %731, %v586
        %v733 = vpop.permute.xlu0 %732
        %736 = vset.pattern.permute.xlu0 0
        %737 = vperm.xlu0 %736, %v587
        %v738 = vpop.permute.xlu0 %737
        %741 = vset.pattern.permute.xlu0 0
        %742 = vperm.xlu0 %741, %v588
        %v743 = vpop.permute.xlu0 %742
        %746 = vset.pattern.permute.xlu0 0
        %747 = vperm.xlu0 %746, %v589
        %v748 = vpop.permute.xlu0 %747
        %751 = vset.pattern.permute.xlu0 0
        %752 = vperm.xlu0 %751, %v590
        %v753 = vpop.permute.xlu0 %752
        %756 = vset.pattern.permute.xlu0 0
        %757 = vperm.xlu0 %756, %v591
        %v758 = vpop.permute.xlu0 %757
        %761 = vset.pattern.permute.xlu0 0
        %762 = vperm.xlu0 %761, %v592
        %v763 = vpop.permute.xlu0 %762
        %766 = vset.pattern.permute.xlu0 0
        %767 = vperm.xlu0 %766, %v593
        %v768 = vpop.permute.xlu0 %767
        %v770 = vmul.f32 %v693, %v260
        %v771 = vmul.f32 %v698, %v261
        %v772 = vmul.f32 %v703, %v262
        %v773 = vmul.f32 %v708, %v263
        %v774 = vmul.f32 %v713, %v264
        %v775 = vmul.f32 %v718, %v265
        %v776 = vmul.f32 %v723, %v266
        %v777 = vmul.f32 %v728, %v267
        %v778 = vmul.f32 %v733, %v268
        %v779 = vmul.f32 %v738, %v269
        %v780 = vmul.f32 %v743, %v270
        %v781 = vmul.f32 %v748, %v271
        %v782 = vmul.f32 %v753, %v272
        %v783 = vmul.f32 %v758, %v273
        %v784 = vmul.f32 %v763, %v274
        %v785 = vmul.f32 %v768, %v275
        %v786 = vadd.f32 %v674, %v770
        %v787 = vadd.f32 %v675, %v771
        %v788 = vadd.f32 %v676, %v772
        %v789 = vadd.f32 %v677, %v773
        %v790 = vadd.f32 %v678, %v774
        %v791 = vadd.f32 %v679, %v775
        %v792 = vadd.f32 %v680, %v776
        %v793 = vadd.f32 %v681, %v777
        %v794 = vadd.f32 %v682, %v778
        %v795 = vadd.f32 %v683, %v779
        %v796 = vadd.f32 %v684, %v780
        %v797 = vadd.f32 %v685, %v781
        %v798 = vadd.f32 %v686, %v782
        %v799 = vadd.f32 %v687, %v783
        %v800 = vadd.f32 %v688, %v784
        %v801 = vadd.f32 %v689, %v785
        %802 = vst [vmem:[%s240] sm:$0xff] %v786
        %803 = vst [vmem:[%s240 + $0x8] sm:$0xff] %v787
        %804 = vst [vmem:[%s240 + $0x10] sm:$0xff] %v788
        %805 = vst [vmem:[%s240 + $0x18] sm:$0xff] %v789
        %806 = vst [vmem:[%s240 + $0x20] sm:$0xff] %v790
        %807 = vst [vmem:[%s240 + $0x28] sm:$0xff] %v791
        %808 = vst [vmem:[%s240 + $0x30] sm:$0xff] %v792
        %809 = vst [vmem:[%s240 + $0x38] sm:$0xff] %v793
        %810 = vst [vmem:[%s240 + $0x40] sm:$0xff] %v794
        %811 = vst [vmem:[%s240 + $0x48] sm:$0xff] %v795
        %812 = vst [vmem:[%s240 + $0x50] sm:$0xff] %v796
        %813 = vst [vmem:[%s240 + $0x58] sm:$0xff] %v797
        %814 = vst [vmem:[%s240 + $0x60] sm:$0xff] %v798
        %815 = vst [vmem:[%s240 + $0x68] sm:$0xff] %v799
        %816 = vst [vmem:[%s240 + $0x70] sm:$0xff] %v800
        %817 = vst [vmem:[%s240 + $0x78] sm:$0xff] %v801
        %s818 = sand.u32 %s104, 1
        %s819 = scalar_lea.sflag [#allocation4], %s818
        %s820 = sand.u32 %s104, 1
        %s821 = smul.addr %s820, 128
        %s822 = scalar_lea.vmem [#allocation8], %s821
        // Predicated region
        $region45: #{tpu_custom_call.1} parent=31 // pred_check
          %p823 = pneg %p114
        $region46: #{tpu_custom_call.1} parent=31 // pred_check_branch
          %825 = sbr.rel (%p823) target = $region48
        $region47: #{tpu_custom_call.1} parent=31 // pred_region
          %s826 = smul.u32 16, %s23
          %s828 = ssub.s32 2048, 2048
          %829 = vsyncadd %s819, %s828
          %s830 = smul.addr %s826, 128
          %s831 = scalar_lea.hbm %s3, %s830
          %s832 = sshll.u32 %s822, 4
          %s833 = int_to_ptr.vmem [resolvable:$true] %s832
          %838 = dma.vmem_to_hbm [thread:$0]  %s833, 2048, %s831, %s819, 128, 128, 8
        $region48: #{tpu_custom_call.1} parent=31 // pred_fallthru
          _
      $region32: #{tpu_custom_call.1} parent=5 // pred_fallthru
        _
      %p839 = scmp.le.s32.totalorder 2, %s18
      // Predicated region
      $region49: #{tpu_custom_call.1} parent=5 // pred_check
        %p840 = pneg %p839
      $region50: #{tpu_custom_call.1} parent=5 // pred_check_branch
        %842 = sbr.rel (%p840) target = $region52
      $region51: #{tpu_custom_call.1} parent=5 // pred_region
        %s843 = ssub.s32 %s18, 2
        // Predicated region
        $region53: #{tpu_custom_call.1} parent=51 // pred_check
          %p844 = pneg %p120
        $region54: #{tpu_custom_call.1} parent=51 // pred_check_branch
          %846 = sbr.rel (%p844) target = $region56
        $region55: #{tpu_custom_call.1} parent=51 // pred_region
          %s847 = sand.u32 %s105, 1
          %s848 = scalar_lea.sflag [#allocation4], %s847
          %s849 = sand.u32 %s105, 1
          %s850 = smul.addr %s849, 128
          %s851 = scalar_lea.vmem [#allocation8], %s850
          %852 = dma.done %s848, 2048
        $region56: #{tpu_custom_call.1} parent=51 // pred_fallthru
          _
      $region52: #{tpu_custom_call.1} parent=5 // pred_fallthru
        _
    $region6: #{tpu_custom_call.1} parent=1 // loop_footer
      %s22 = sadd.s32 1, %s18
    $region7: #{tpu_custom_call.1} parent=1 // loop_footer_branch
      %17 = sbr.rel target = $region3
    $region8: #{tpu_custom_call.1} parent=1 // loop_exit
      _
    %853 = vsyncpa [#allocation3], 1
    %s854 = scalar_lea.sflag [#allocation3], 1
    %855 = vsyncpa %s854, 1
    %856 = vsyncpa [#allocation6], 1
    %s857 = scalar_lea.sflag [#allocation6], 1
    %858 = vsyncpa %s857, 1
    %859 = vsyncpa [#allocation4], 1
    %s860 = scalar_lea.sflag [#allocation4], 1
    %861 = vsyncpa %s860, 1

</llo_original>
